<compile_context>
chip_gen: v5e
topology: v5e:2x2
jax: 0.10.0
libtpu: 0.0.40
codegen_flags: <defaults>
</compile_context>

<pallas_src>
import functools

import jax
import jax.numpy as jnp
from jax.experimental import pallas as pl
from jax.experimental.pallas import tpu as pltpu

LANE = 128      # vreg lane width
SUBLANE = 8     # vreg sublane width (f32)

_SINGLE_BUFFER_OK = None  # lazily probed support for pl.Buffered(1)


def _round_up(n, m):
    return -(-n // m) * m


def _sublane_for(dtype):
    # f32 -> 8, bf16 -> 16, int8/fp8 -> 32 (packed sublane rows).
    return max(SUBLANE, 32 // jnp.dtype(dtype).itemsize)


def _default_vmem_limit_bytes():
    # Generation-aware VMEM budget: ~3/4 of physical VMEM (~96 MiB on
    # v5e/v6e's 128 MiB, ~48 MiB on v7x's 64 MiB), capped at 100 MiB.
    try:
        cap = int(pltpu.get_tpu_info().vmem_capacity_bytes)
        return int(min(cap * 3 // 4, 100 * 1024 * 1024))
    except Exception:
        return 48 * 1024 * 1024  # v7x-safe fallback


def _single_buffer_supported():
    """Probe once whether BlockSpec(pipeline_mode=pl.Buffered(1)) lowers."""
    global _SINGLE_BUFFER_OK
    if _SINGLE_BUFFER_OK is None:
        try:
            def _copy(x_ref, o_ref):
                o_ref[...] = x_ref[...]
            fn = pl.pallas_call(
                _copy,
                out_shape=jax.ShapeDtypeStruct((8, 128), jnp.float32),
                grid=(1,),
                in_specs=[pl.BlockSpec((8, 128), lambda i: (0, 0),
                                       pipeline_mode=pl.Buffered(1))],
                out_specs=pl.BlockSpec((8, 128), lambda i: (0, 0)),
            )
            jax.jit(fn).lower(jnp.zeros((8, 128), jnp.float32)).compile()
            _SINGLE_BUFFER_OK = True
        except Exception:
            _SINGLE_BUFFER_OK = False
    return _SINGLE_BUFFER_OK


def _mlp_kernel(x_ref, w1_ref, b1_ref, w2_ref, b2_ref, o_ref, acc_ref):
    """One (batch-tile, hidden-tile) grid step of relu(x@W1 + b1) @ W2 + b2.

    Grid axis 1 is the hidden-dim reduction; partial contributions
    relu(x @ W1[:, hb] + b1[hb]) @ W2[hb, :] are exact because ReLU is
    elementwise per hidden column. All accumulation is f32.
    """
    j = pl.program_id(1)

    @pl.when(j == 0)
    def _():
        acc_ref[...] = jnp.zeros_like(acc_ref)

    # Layer 1 on the MXU (f32 accumulation), bias + ReLU on the VPU in f32.
    h = jnp.dot(x_ref[...], w1_ref[...], preferred_element_type=jnp.float32)
    h = jnp.maximum(h + b1_ref[...], 0.0)
    # Layer 2: cast back to operand dtype for the fast MXU path, f32 accum.
    acc_ref[...] += jnp.dot(h.astype(w2_ref.dtype), w2_ref[...],
                            preferred_element_type=jnp.float32)

    @pl.when(j == pl.num_programs(1) - 1)
    def _():
        o_ref[...] = (acc_ref[...] + b2_ref[...]).astype(o_ref.dtype)


def prepare_mlp_params(w1, b1, w2, b2, *, compute_dtype=jnp.bfloat16,
                       vmem_limit_bytes=None):
    """Pad/convert the weights ONCE (hoisted out of the per-call path).

    w1: (K, H), b1: (H,), w2: (H, O), b2: (O,) in x @ W + b layout
    (transpose of PyTorch nn.Linear's (out, in) weight).
    """
    K, H = w1.shape
    O = w2.shape[1]
    compute_dtype = jnp.dtype(compute_dtype)

    Kp = _round_up(K, LANE)
    Op = _round_up(O, LANE)
    Hp = _round_up(H, LANE)

    if vmem_limit_bytes is None:
        vmem_limit_bytes = _default_vmem_limit_bytes()

    # Hidden-dim tile: keep each step's weight slabs (Kp x TH) + (TH x Op)
    # within ~1/4 of the VMEM budget; the rest covers activations, the f32
    # accumulator and pipeline buffers. For small models this is one step.
    itemsize = compute_dtype.itemsize
    budget = max(vmem_limit_bytes // 4, LANE * (Kp + Op) * itemsize)
    max_th = budget // (itemsize * (Kp + Op))
    TH = min(Hp, max(LANE, (max_th // LANE) * LANE))
    Hp = _round_up(Hp, TH)   # grid divides evenly; extra columns stay zero

    # Zero padding keeps the math exact: padded W1 columns + zero b1 give
    # relu(0)=0, and the matching zero W2 rows contribute nothing.
    w1_p = jnp.zeros((Kp, Hp), compute_dtype).at[:K, :H].set(
        w1.astype(compute_dtype))
    b1_p = jnp.zeros((1, Hp), jnp.float32).at[0, :H].set(
        b1.reshape(-1).astype(jnp.float32))
    w2_p = jnp.zeros((Hp, Op), compute_dtype).at[:H, :O].set(
        w2.astype(compute_dtype))
    b2_p = jnp.zeros((1, Op), jnp.float32).at[0, :O].set(
        b2.reshape(-1).astype(jnp.float32))

    return {
        "w1": w1_p, "b1": b1_p, "w2": w2_p, "b2": b2_p,
        "K": int(K), "H": int(H), "O": int(O), "TH": int(TH),
        "compute_dtype": compute_dtype,
        "vmem_limit_bytes": int(vmem_limit_bytes),
        "single_buffer": bool(_single_buffer_supported()),
    }


@functools.partial(
    jax.jit,
    static_argnames=("K", "O", "TH", "block_b", "compute_dtype", "out_dtype",
                     "vmem_limit_bytes", "single_buffer"))
def _forward(x, w1_p, b1_p, w2_p, b2_p, *, K, O, TH, block_b, compute_dtype,
             out_dtype, vmem_limit_bytes, single_buffer):
    B = x.shape[0]
    Kp, Hp = w1_p.shape
    Op = w2_p.shape[1]
    nh = Hp // TH

    # Batch tile: dtype-aware sublane multiple, >=2 grid steps when the batch
    # allows (v7x megacore), capped by block_b and by the (TB, TH) f32
    # intermediate budget (~2 MiB for h + its recast copy).
    sub = _sublane_for(compute_dtype)
    Bp_min = _round_up(B, sub)
    tb_two_steps = _round_up((Bp_min + 1) // 2, sub)
    tb_h_budget = max(sub, ((2 * 1024 * 1024) // (6 * TH)) // sub * sub)
    TB = max(sub, min(_round_up(block_b, sub), tb_two_steps, tb_h_budget,
                      Bp_min))
    Bp = _round_up(B, TB)
    nb = Bp // TB

    # Per-call activation traffic: cast only if needed, pad only if needed.
    x_in = x if x.dtype == jnp.dtype(compute_dtype) else x.astype(compute_dtype)
    if (B, K) != (Bp, Kp):
        x_in = jnp.pad(x_in, ((0, Bp - B), (0, Kp - K)))

    def spec(shape, index_map, resident):
        if resident and single_buffer:
            # Constant block index -> no need for double buffering; halves the
            # VMEM reserved for resident weights/biases.
            return pl.BlockSpec(shape, index_map, pipeline_mode=pl.Buffered(1))
        return pl.BlockSpec(shape, index_map)

    weights_resident = nh == 1   # block index constant across the whole grid

    in_specs = [
        spec((TB, Kp), lambda i, j: (i, 0), False),              # x tiles
        spec((Kp, TH), lambda i, j: (0, j), weights_resident),   # W1
        spec((1, TH), lambda i, j: (0, j), weights_resident),    # b1 (f32)
        spec((TH, Op), lambda i, j: (j, 0), weights_resident),   # W2
        spec((1, Op), lambda i, j: (0, 0), True),                # b2 (f32)
    ]
    out_specs = pl.BlockSpec((TB, Op), lambda i, j: (i, 0))      # lane-dense

    itemsize = jnp.dtype(compute_dtype).itemsize
    cost = pl.CostEstimate(
        flops=2 * Bp * Hp * (Kp + Op),
        transcendentals=0,
        bytes_accessed=(Bp * Kp * itemsize
                        + (nb if nh > 1 else 1) * (Kp * Hp + Hp * Op) * itemsize
                        + (Hp + Op) * 4
                        + Bp * Op * jnp.dtype(out_dtype).itemsize),
    )

    out_p = pl.pallas_call(
        _mlp_kernel,
        out_shape=jax.ShapeDtypeStruct((Bp, Op), out_dtype),
        grid=(nb, nh),
        in_specs=in_specs,
        out_specs=out_specs,
        scratch_shapes=[pltpu.VMEM((TB, Op), jnp.float32)],
        compiler_params=pltpu.CompilerParams(
            dimension_semantics=("parallel", "arbitrary"),
            vmem_limit_bytes=vmem_limit_bytes,
        ),
        cost_estimate=cost,
    )(x_in, w1_p, b1_p, w2_p, b2_p)

    if (Bp, Op) != (B, O):
        out_p = out_p[:B, :O]
    return out_p


def basic_mlp_forward(x, params, *, block_b=256, out_dtype=jnp.float32):
    """Forward pass of BasicMLP: relu(x @ w1 + b1) @ w2 + b2 (padded params)."""
    return _forward(
        x, params["w1"], params["b1"], params["w2"], params["b2"],
        K=params["K"], O=params["O"], TH=params["TH"],
        block_b=int(block_b),
        compute_dtype=params["compute_dtype"],
        out_dtype=jnp.dtype(out_dtype),
        vmem_limit_bytes=params["vmem_limit_bytes"],
        single_buffer=params["single_buffer"],
    )


def init_linear_params(key, fan_in, fan_out):
    """Mimics torch.nn.Linear default init:
    uniform(-1/sqrt(fan_in), 1/sqrt(fan_in)) for weight and bias.
    Weight returned as (fan_in, fan_out) = transpose of PyTorch (out, in)."""
    kw, kb = jax.random.split(key)
    bound = 1.0 / (fan_in ** 0.5)
    w = jax.random.uniform(kw, (fan_in, fan_out), jnp.float32, -bound, bound)
    b = jax.random.uniform(kb, (fan_out,), jnp.float32, -bound, bound)
    return w, b


if __name__ == "__main__":
    # BasicMLP(n_inputs=16, hidden_size=32, n_outputs=8).
    n_inputs, hidden, n_outputs = 16, 32, 8

    key = jax.random.PRNGKey(0)
    kx, k1, k2, kx2 = jax.random.split(key, 4)

    w1, b1 = init_linear_params(k1, n_inputs, hidden)
    w2, b2 = init_linear_params(k2, hidden, n_outputs)

    def ref_mlp(xr):
        return jnp.maximum(xr @ w1 + b1[None, :], 0.0) @ w2 + b2[None, :]

    # --- Small case, f32 operands: tight correctness check ------------------
    params_f32 = prepare_mlp_params(w1, b1, w2, b2, compute_dtype=jnp.float32)
    batch = 8
    x = jax.random.normal(kx, (batch, n_inputs), jnp.float32)
    out = basic_mlp_forward(x, params_f32)
    jax.block_until_ready(out)
    assert out.shape == (batch, n_outputs)
    assert jnp.allclose(out, ref_mlp(x), atol=1e-5, rtol=1e-5)

    # --- Larger batch, bf16 operands + f32 accumulation, multi-tile grid ----
    params_bf16 = prepare_mlp_params(w1, b1, w2, b2, compute_dtype=jnp.bfloat16)
    batch2 = 256
    x2 = jax.random.normal(kx2, (batch2, n_inputs), jnp.float32)
    out2 = basic_mlp_forward(x2, params_bf16, block_b=64)
    jax.block_until_ready(out2)
    assert out2.shape == (batch2, n_outputs)
    assert jnp.allclose(out2, ref_mlp(x2), atol=1e-1, rtol=1e-1)

    print("KERNEL_OK")
</pallas_src>

<mosaic_0001>
module attributes {stable_mosaic.version = 11 : i64} {
  func.func @_mlp_kernel(%arg0: i32, %arg1: i32, %arg2: memref<8x128xf32, #tpu.memory_space<vmem>>, %arg3: memref<128x128xf32, #tpu.memory_space<vmem>>, %arg4: memref<1x128xf32, #tpu.memory_space<vmem>>, %arg5: memref<128x128xf32, #tpu.memory_space<vmem>>, %arg6: memref<1x128xf32, #tpu.memory_space<vmem>>, %arg7: memref<8x128xf32, #tpu.memory_space<vmem>>, %arg8: memref<8x128xf32, #tpu.memory_space<vmem>>) attributes {dimension_semantics = [#tpu.dimension_semantics<parallel>, #tpu.dimension_semantics<arbitrary>], iteration_bounds = array<i64: 1, 1>, scalar_prefetch = 0 : i64, scratch_operands = 1 : i64, tpu.core_type = #tpu.core_type<tc>, window_params = [{transform_indices = @transform_0, window_bounds = array<i64: 8, 128>}, {transform_indices = @transform_1, window_bounds = array<i64: 128, 128>}, {transform_indices = @transform_2, window_bounds = array<i64: 1, 128>}, {transform_indices = @transform_3, window_bounds = array<i64: 128, 128>}, {pipeline_mode = #tpu.pipeline_mode<synchronous>, transform_indices = @transform_4, window_bounds = array<i64: 1, 128>}, {transform_indices = @transform_5, window_bounds = array<i64: 8, 128>}]} {
    %c0_i32 = arith.constant 0 : i32
    %0 = arith.cmpi eq, %arg1, %c0_i32 : i32
    %1 = arith.extui %0 : i1 to i32
    %c0_i32_0 = arith.constant 0 : i32
    %2 = arith.cmpi ne, %1, %c0_i32_0 : i32
    scf.if %2 {
      %cst_16 = arith.constant 0.000000e+00 : f32
      %19 = vector.broadcast %cst_16 : f32 to vector<8x128xf32>
      %c0_17 = arith.constant 0 : index
      %c0_18 = arith.constant 0 : index
      %20 = vector.load %arg8[%c0_17, %c0_18] : memref<8x128xf32, #tpu.memory_space<vmem>>, vector<8x128xf32>
      tpu.vector_store %arg8[%c0_17, %c0_18], %19 {strides = array<i32>} : memref<8x128xf32, #tpu.memory_space<vmem>>, vector<8x128xf32>,
    } else {
    }
    %c0 = arith.constant 0 : index
    %c0_1 = arith.constant 0 : index
    %3 = vector.load %arg2[%c0, %c0_1] : memref<8x128xf32, #tpu.memory_space<vmem>>, vector<8x128xf32>
    %c0_2 = arith.constant 0 : index
    %c0_3 = arith.constant 0 : index
    %4 = vector.load %arg3[%c0_2, %c0_3] : memref<128x128xf32, #tpu.memory_space<vmem>>, vector<128x128xf32>
    %cst = arith.constant dense<0.000000e+00> : vector<8x128xf32>
    %5 = tpu.matmul %3, %4, %cst {dimension_numbers = #tpu.dot_dimension_numbers<[1], [0], [0], [1], [0, 0, 1, 1], [], []>} : vector<8x128xf32>, vector<128x128xf32>, vector<8x128xf32> -> vector<8x128xf32>
    %c0_4 = arith.constant 0 : index
    %c0_5 = arith.constant 0 : index
    %6 = vector.load %arg4[%c0_4, %c0_5] : memref<1x128xf32, #tpu.memory_space<vmem>>, vector<1x128xf32>
    %7 = vector.broadcast %6 : vector<1x128xf32> to vector<8x128xf32>
    %8 = arith.addf %5, %7 : vector<8x128xf32>
    %cst_6 = arith.constant 0.000000e+00 : f32
    %9 = vector.broadcast %cst_6 : f32 to vector<8x128xf32>
    %10 = arith.maximumf %8, %9 : vector<8x128xf32>
    %c0_7 = arith.constant 0 : index
    %c0_8 = arith.constant 0 : index
    %11 = vector.load %arg8[%c0_7, %c0_8] : memref<8x128xf32, #tpu.memory_space<vmem>>, vector<8x128xf32>
    %c0_9 = arith.constant 0 : index
    %c0_10 = arith.constant 0 : index
    %12 = vector.load %arg5[%c0_9, %c0_10] : memref<128x128xf32, #tpu.memory_space<vmem>>, vector<128x128xf32>
    %cst_11 = arith.constant dense<0.000000e+00> : vector<8x128xf32>
    %13 = tpu.matmul %10, %12, %cst_11 {dimension_numbers = #tpu.dot_dimension_numbers<[1], [0], [0], [1], [0, 0, 1, 1], [], []>} : vector<8x128xf32>, vector<128x128xf32>, vector<8x128xf32> -> vector<8x128xf32>
    %14 = arith.addf %11, %13 : vector<8x128xf32>
    %c0_12 = arith.constant 0 : index
    %c0_13 = arith.constant 0 : index
    %15 = vector.load %arg8[%c0_12, %c0_13] : memref<8x128xf32, #tpu.memory_space<vmem>>, vector<8x128xf32>
    tpu.vector_store %arg8[%c0_12, %c0_13], %14 {strides = array<i32>} : memref<8x128xf32, #tpu.memory_space<vmem>>, vector<8x128xf32>,
    %c0_i32_14 = arith.constant 0 : i32
    %16 = arith.cmpi eq, %arg1, %c0_i32_14 : i32
    %17 = arith.extui %16 : i1 to i32
    %c0_i32_15 = arith.constant 0 : i32
    %18 = arith.cmpi ne, %17, %c0_i32_15 : i32
    scf.if %18 {
      %c0_16 = arith.constant 0 : index
      %c0_17 = arith.constant 0 : index
      %19 = vector.load %arg8[%c0_16, %c0_17] : memref<8x128xf32, #tpu.memory_space<vmem>>, vector<8x128xf32>
      %c0_18 = arith.constant 0 : index
      %c0_19 = arith.constant 0 : index
      %20 = vector.load %arg6[%c0_18, %c0_19] : memref<1x128xf32, #tpu.memory_space<vmem>>, vector<1x128xf32>
      %21 = vector.broadcast %20 : vector<1x128xf32> to vector<8x128xf32>
      %22 = arith.addf %19, %21 : vector<8x128xf32>
      %c0_20 = arith.constant 0 : index
      %c0_21 = arith.constant 0 : index
      %23 = vector.load %arg7[%c0_20, %c0_21] : memref<8x128xf32, #tpu.memory_space<vmem>>, vector<8x128xf32>
      tpu.vector_store %arg7[%c0_20, %c0_21], %22 {strides = array<i32>} : memref<8x128xf32, #tpu.memory_space<vmem>>, vector<8x128xf32>,
    } else {
    }
    return
  }
  func.func @transform_0(%arg0: i32, %arg1: i32) -> (i32, i32) {
    %c0_i32 = arith.constant 0 : i32
    %c0_i32_0 = arith.constant 0 : i32
    return %arg0, %c0_i32 : i32, i32
  }
  func.func @transform_1(%arg0: i32, %arg1: i32) -> (i32, i32) {
    %c0_i32 = arith.constant 0 : i32
    %c0_i32_0 = arith.constant 0 : i32
    return %c0_i32, %arg1 : i32, i32
  }
  func.func @transform_2(%arg0: i32, %arg1: i32) -> (i32, i32) {
    %c0_i32 = arith.constant 0 : i32
    %c0_i32_0 = arith.constant 0 : i32
    return %c0_i32, %arg1 : i32, i32
  }
  func.func @transform_3(%arg0: i32, %arg1: i32) -> (i32, i32) {
    %c0_i32 = arith.constant 0 : i32
    %c0_i32_0 = arith.constant 0 : i32
    return %arg1, %c0_i32 : i32, i32
  }
  func.func @transform_4(%arg0: i32, %arg1: i32) -> (i32, i32) {
    %c0_i32 = arith.constant 0 : i32
    %c0_i32_0 = arith.constant 0 : i32
    %c0_i32_1 = arith.constant 0 : i32
    return %c0_i32, %c0_i32_0 : i32, i32
  }
  func.func @transform_5(%arg0: i32, %arg1: i32) -> (i32, i32) {
    %c0_i32 = arith.constant 0 : i32
    %c0_i32_0 = arith.constant 0 : i32
    return %arg0, %c0_i32 : i32, i32
  }
}

</mosaic_0001>

<llo_original>
// kernel: _forward.1
$region0: #{_forward.1}
  #allocation0 [shape = 'u32[]', space=smem, size = 0x4, offset = 0x4, fixed_abs, tag = 'smem constant byte address 0x4 - core index']
  #allocation1 [shape = 'u32[72,128]{1,0:T(1,128)}', space=vmem, size = 0x9000, scoped, tag = 'internal scratch']
  #allocation2 [shape = 'f32[8,128]{1,0:T(8,128)}', space=vmem, size = 0x1000, scoped, tag = 'scratch operand']
  %s0 = inlined_call_operand.vmem [shape: f32[8,128], index: 0, kind: input, shape index: {}]
  %s1 = inlined_call_operand.hbm [shape: f32[128,128], index: 1, kind: input, shape index: {}]
  %s2 = inlined_call_operand.vmem [shape: f32[1,128], index: 2, kind: input, shape index: {}]
  %s3 = inlined_call_operand.hbm [shape: f32[128,128], index: 3, kind: input, shape index: {}]
  %s4 = inlined_call_operand.vmem [shape: f32[1,128], index: 4, kind: input, shape index: {}]
  %s5 = inlined_call_operand.hbm [shape: f32[8,128], index: 5, kind: output, shape index: {}]
  %s6 = sld [smem:[#allocation0]]
  $region46: #{_forward.1} parent=0
    _
  %s8 = ssub.s32 1, %s6
  %s9 = scalar_select 0, %s8, %s6
  $region1: #{_forward.1} parent=0
    #allocation3 [shape = 'u8[65536]{0}', space=vmem, size = 0x10000, scoped, tag = 'input window, operand 1, single buffered']
    #allocation4 [shape = 's32[1]{0}', space=sflag, size = 0x4, scoped, tag = 'scoped memory for _forward.1']
    #allocation5 [shape = 's32[1]{0}', space=sflag, size = 0x4, scoped, tag = 'scoped memory for _forward.1']
    #allocation6 [shape = 'u8[65536]{0}', space=vmem, size = 0x10000, scoped, tag = 'input window, operand 3, single buffered']
    #allocation7 [shape = 's32[1]{0}', space=sflag, size = 0x4, scoped, tag = 'scoped memory for _forward.1']
    #allocation8 [shape = 'u8[4096]{0}', space=vmem, size = 0x1000, scoped, tag = 'output window, operand 0, single buffered']
    %10 = vsyncpa [#allocation4], 0
    %11 = vsyncpa [#allocation7], 0
    %12 = vsyncpa [#allocation5], 0
    // Predicated region
    $region2: #{_forward.1} parent=1 // pred_check
      _
    $region3: #{_forward.1} parent=1 // pred_check_branch
      %14 = sbr.rel (0) target = $region5
    $region4: #{_forward.1} parent=1 // pred_region
      _
    $region5: #{_forward.1} parent=1 // pred_fallthru
      _
    // Predicated region
    $region6: #{_forward.1} parent=1 // pred_check
      _
    $region7: #{_forward.1} parent=1 // pred_check_branch
      %16 = sbr.rel (0) target = $region9
    $region8: #{_forward.1} parent=1 // pred_region
      %18 = vsyncadd [#allocation4], 0
      %s19 = sshll.u32 %s1, 4
      %s20 = int_to_ptr.hbm [resolvable:$true] %s19
      %s21 = sshll.u32 [#allocation3], 4
      %s22 = int_to_ptr.vmem [resolvable:$true] %s21
      %27 = dma.hbm_to_vmem [thread:$0]  %s20, 2048, %s22, [#allocation4], 128, 128, 8
    $region9: #{_forward.1} parent=1 // pred_fallthru
      _
    // Predicated region
    $region10: #{_forward.1} parent=1 // pred_check
      _
    $region11: #{_forward.1} parent=1 // pred_check_branch
      %29 = sbr.rel (0) target = $region13
    $region12: #{_forward.1} parent=1 // pred_region
      _
    $region13: #{_forward.1} parent=1 // pred_fallthru
      _
    // Predicated region
    $region14: #{_forward.1} parent=1 // pred_check
      _
    $region15: #{_forward.1} parent=1 // pred_check_branch
      %31 = sbr.rel (0) target = $region17
    $region16: #{_forward.1} parent=1 // pred_region
      %33 = vsyncadd [#allocation7], 0
      %s34 = sshll.u32 %s3, 4
      %s35 = int_to_ptr.hbm [resolvable:$true] %s34
      %s36 = sshll.u32 [#allocation6], 4
      %s37 = int_to_ptr.vmem [resolvable:$true] %s36
      %42 = dma.hbm_to_vmem [thread:$0]  %s35, 2048, %s37, [#allocation7], 128, 128, 8
    $region17: #{_forward.1} parent=1 // pred_fallthru
      _
    // Predicated region
    $region18: #{_forward.1} parent=1 // pred_check
      _
    $region19: #{_forward.1} parent=1 // pred_check_branch
      %44 = sbr.rel (0) target = $region21
    $region20: #{_forward.1} parent=1 // pred_region
      _
    $region21: #{_forward.1} parent=1 // pred_fallthru
      _
    // Predicated region
    $region22: #{_forward.1} parent=1 // pred_check
      _
    $region23: #{_forward.1} parent=1 // pred_check_branch
      %46 = sbr.rel (0) target = $region25
    $region24: #{_forward.1} parent=1 // pred_region
      %48 = dma.done [#allocation4], 2048
    $region25: #{_forward.1} parent=1 // pred_fallthru
      _
    // Predicated region
    $region26: #{_forward.1} parent=1 // pred_check
      _
    $region27: #{_forward.1} parent=1 // pred_check_branch
      %50 = sbr.rel (0) target = $region29
    $region28: #{_forward.1} parent=1 // pred_region
      %52 = dma.done [#allocation7], 2048
    $region29: #{_forward.1} parent=1 // pred_fallthru
      _
    %p53 = scmp.eq.s32.totalorder 0, 0
    // Predicated region
    $region30: #{_forward.1} parent=1 // pred_check
      %p54 = pneg %p53
    $region31: #{_forward.1} parent=1 // pred_check_branch
      %56 = sbr.rel (%p54) target = $region33
    $region32: #{_forward.1} parent=1 // pred_region
      %57 = vst [vmem:[#allocation2] sm:$0xff] 0.0
    $region33: #{_forward.1} parent=1 // pred_fallthru
      _
    %v58 = vld [vmem:[%s0] sm:$0xff]
    %v59 = vld [vmem:[#allocation3] sm:$0xff]
    %v60 = vld [vmem:[#allocation3 + $0x8] sm:$0xff]
    %v61 = vld [vmem:[#allocation3 + $0x10] sm:$0xff]
    %v62 = vld [vmem:[#allocation3 + $0x18] sm:$0xff]
    %v63 = vld [vmem:[#allocation3 + $0x20] sm:$0xff]
    %v64 = vld [vmem:[#allocation3 + $0x28] sm:$0xff]
    %v65 = vld [vmem:[#allocation3 + $0x30] sm:$0xff]
    %v66 = vld [vmem:[#allocation3 + $0x38] sm:$0xff]
    %v67 = vld [vmem:[#allocation3 + $0x40] sm:$0xff]
    %v68 = vld [vmem:[#allocation3 + $0x48] sm:$0xff]
    %v69 = vld [vmem:[#allocation3 + $0x50] sm:$0xff]
    %v70 = vld [vmem:[#allocation3 + $0x58] sm:$0xff]
    %v71 = vld [vmem:[#allocation3 + $0x60] sm:$0xff]
    %v72 = vld [vmem:[#allocation3 + $0x68] sm:$0xff]
    %v73 = vld [vmem:[#allocation3 + $0x70] sm:$0xff]
    %v74 = vld [vmem:[#allocation3 + $0x78] sm:$0xff]
    %v75 = vld [vmem:[%s2] sm:$0x1]
    %v77 = vperm.slane %v75, 0
    %79 = vmatpush.msra.mxu0 %v74
    %80 = vmatpush.msra.mxu0 %v73
    %81 = vmatpush.msra.mxu0 %v72
    %82 = vmatpush.msra.mxu0 %v71
    %83 = vmatpush.msra.mxu0 %v70
    %84 = vmatpush.msra.mxu0 %v69
    %85 = vmatpush.msra.mxu0 %v68
    %86 = vmatpush.msra.mxu0 %v67
    %87 = vmatpush.msra.mxu0 %v66
    %88 = vmatpush.msra.mxu0 %v65
    %89 = vmatpush.msra.mxu0 %v64
    %90 = vmatpush.msra.mxu0 %v63
    %91 = vmatpush.msra.mxu0 %v62
    %92 = vmatpush.msra.mxu0 %v61
    %93 = vmatpush.msra.mxu0 %v60
    %94 = vmatpush.msra.mxu0 %v59
    %95 = vmatmul.f32.gmra.mxu0 %v58
    %v96 = vpop.f32.mrf.mxu0
    %v97 = vadd.f32 %v77, %v96
    %98 = vdwg.mxu0
    %v99 = vmax.f32 %v97, 0.0
    %v100 = vld [vmem:[#allocation2] sm:$0xff]
    %v101 = vld [vmem:[#allocation6] sm:$0xff]
    %v102 = vld [vmem:[#allocation6 + $0x8] sm:$0xff]
    %v103 = vld [vmem:[#allocation6 + $0x10] sm:$0xff]
    %v104 = vld [vmem:[#allocation6 + $0x18] sm:$0xff]
    %v105 = vld [vmem:[#allocation6 + $0x20] sm:$0xff]
    %v106 = vld [vmem:[#allocation6 + $0x28] sm:$0xff]
    %v107 = vld [vmem:[#allocation6 + $0x30] sm:$0xff]
    %v108 = vld [vmem:[#allocation6 + $0x38] sm:$0xff]
    %v109 = vld [vmem:[#allocation6 + $0x40] sm:$0xff]
    %v110 = vld [vmem:[#allocation6 + $0x48] sm:$0xff]
    %v111 = vld [vmem:[#allocation6 + $0x50] sm:$0xff]
    %v112 = vld [vmem:[#allocation6 + $0x58] sm:$0xff]
    %v113 = vld [vmem:[#allocation6 + $0x60] sm:$0xff]
    %v114 = vld [vmem:[#allocation6 + $0x68] sm:$0xff]
    %v115 = vld [vmem:[#allocation6 + $0x70] sm:$0xff]
    %v116 = vld [vmem:[#allocation6 + $0x78] sm:$0xff]
    %117 = vmatpush.msra.mxu0 %v116
    %118 = vmatpush.msra.mxu0 %v115
    %119 = vmatpush.msra.mxu0 %v114
    %120 = vmatpush.msra.mxu0 %v113
    %121 = vmatpush.msra.mxu0 %v112
    %122 = vmatpush.msra.mxu0 %v111
    %123 = vmatpush.msra.mxu0 %v110
    %124 = vmatpush.msra.mxu0 %v109
    %125 = vmatpush.msra.mxu0 %v108
    %126 = vmatpush.msra.mxu0 %v107
    %127 = vmatpush.msra.mxu0 %v106
    %128 = vmatpush.msra.mxu0 %v105
    %129 = vmatpush.msra.mxu0 %v104
    %130 = vmatpush.msra.mxu0 %v103
    %131 = vmatpush.msra.mxu0 %v102
    %132 = vmatpush.msra.mxu0 %v101
    %133 = vmatmul.f32.gmra.mxu0 %v99
    %v134 = vpop.f32.mrf.mxu0
    %v135 = vadd.f32 0.0, %v134
    %136 = vdwg.mxu0
    %v137 = vadd.f32 %v100, %v135
    %138 = vst [vmem:[#allocation2] sm:$0xff] %v137
    // Predicated region
    $region34: #{_forward.1} parent=1 // pred_check
      %p139 = pneg %p53
    $region35: #{_forward.1} parent=1 // pred_check_branch
      %141 = sbr.rel (%p139) target = $region37
    $region36: #{_forward.1} parent=1 // pred_region
      %v142 = vld [vmem:[#allocation2] sm:$0xff]
      %v143 = vld [vmem:[%s4] sm:$0x1]
      %v145 = vperm.slane %v143, 0
      %v147 = vadd.f32 %v142, %v145
      %148 = vst [vmem:[#allocation8] sm:$0xff] %v147
    $region37: #{_forward.1} parent=1 // pred_fallthru
      _
    // Predicated region
    $region38: #{_forward.1} parent=1 // pred_check
      _
    $region39: #{_forward.1} parent=1 // pred_check_branch
      %150 = sbr.rel (0) target = $region41
    $region40: #{_forward.1} parent=1 // pred_region
      %152 = vsyncadd [#allocation5], 0
      %s154 = sshll.u32 [#allocation8], 4
      %s155 = int_to_ptr.vmem [resolvable:$true] %s154
      %s156 = sshll.u32 %s5, 4
      %s157 = int_to_ptr.hbm [resolvable:$true] %s156
      %159 = dma.vmem_to_hbm [thread:$0]  %s155, 128, %s157, [#allocation5]
    $region41: #{_forward.1} parent=1 // pred_fallthru
      _
    // Predicated region
    $region42: #{_forward.1} parent=1 // pred_check
      _
    $region43: #{_forward.1} parent=1 // pred_check_branch
      %161 = sbr.rel (0) target = $region45
    $region44: #{_forward.1} parent=1 // pred_region
      %163 = dma.done [#allocation5], 128
    $region45: #{_forward.1} parent=1 // pred_fallthru
      _
    %164 = vsyncpa [#allocation4], 1
    %165 = vsyncpa [#allocation7], 1
    %166 = vsyncpa [#allocation5], 1

</llo_original>
